<compile_context>
chip_gen: v7x
topology: tpu7x:2x2x1
jax: 0.10.0
libtpu: 0.0.40
codegen_flags: <defaults>
</compile_context>

<pallas_src>
import jax
import jax.numpy as jnp
import numpy as np
from jax.experimental import pallas as pl
from jax.experimental.pallas import tpu as pltpu

B = 8            # batch (== sublane count, so pre-broadcast params are aligned tiles)
E = 32           # embedding_size
C = 16           # col_encoding_size
NUM_F = 8        # numeric column width (v[2].shape[0] - 1)
VOCAB = 10       # categorical vocabulary size (len(v[1]))
N_COLS = 3       # len(interface)
LN_EPS = 1e-5

OUT_W = (N_COLS + 1) * (E + C)   # 192 : flat per-row output width
LHS_W = 2 * E                    # 64  : contraction width of the fused matmul
CAT_OFF = 16                     # one-hot lane offset inside the LHS
ACT_W = E                        # 32  : packed activation slab width
# packed parameter slab row offsets (all multiples of 8 -> aligned sublane slices)
ROW_CONST = LHS_W                # rows 64:72   constant lanes (pre-broadcast)
ROW_T2VW = ROW_CONST + B         # rows 72:80   Time2Vec weight
ROW_T2VB = ROW_T2VW + B          # rows 80:88   Time2Vec bias
ROW_LNG = ROW_T2VB + B           # rows 88:96   LayerNorm gamma
ROW_LNB = ROW_LNG + B            # rows 96:104  LayerNorm beta
PSLAB_ROWS = ROW_LNB + B         # 104


def tabular_kernel(act_ref, pslab_ref, out_ref):
    act = act_ref[...]                                       # (B, 32)
    lane = jax.lax.broadcasted_iota(jnp.int32, (B, E), 1)

    # ---- time column: Time2Vec -> LayerNorm -> ReLU (params are aligned (8,32) tiles) ----
    x_time = act[:, NUM_F + 1:NUM_F + 2]                     # (B, 1)
    t2v_w = pslab_ref[ROW_T2VW:ROW_T2VW + B, 0:E]
    t2v_b = pslab_ref[ROW_T2VB:ROW_T2VB + B, 0:E]
    ln_g = pslab_ref[ROW_LNG:ROW_LNG + B, 0:E]
    ln_b = pslab_ref[ROW_LNB:ROW_LNB + B, 0:E]
    full = x_time * t2v_w + t2v_b                            # (B, E)
    t2v = jnp.where(lane == 0, full, jnp.sin(full))          # lane 0 linear, rest sin()
    mean = jnp.mean(t2v, axis=-1, keepdims=True)
    var = jnp.mean((t2v - mean) ** 2, axis=-1, keepdims=True)
    ln = (t2v - mean) * jax.lax.rsqrt(var + LN_EPS) * ln_g + ln_b
    act_t = jnp.maximum(ln, 0.0)                             # (B, E)

    # ---- fused LHS: x_num at lanes 0:8, one-hot(cat) at lanes 16:26, act_t at 32:64 ----
    idx = act[:, NUM_F:NUM_F + 1].astype(jnp.int32)          # (B, 1), exact for small ints
    num_part = jnp.where(lane < NUM_F, act, 0.0)             # zero the idx/time/pad lanes
    onehot = jnp.where(lane == idx + CAT_OFF, 1.0, 0.0)      # one-hot via offset iota-compare
    lhs = jnp.concatenate([num_part + onehot, act_t], axis=1)   # (B, 64)

    # ---- ONE block-diagonal MXU matmul + constant add + ONE lane-dense store ----
    w = pslab_ref[0:LHS_W, :]                                # (64, 192)
    const = pslab_ref[ROW_CONST:ROW_CONST + B, :]            # (B, 192)
    out_ref[...] = jnp.dot(lhs, w, preferred_element_type=jnp.float32) + const


def pack_params(p):
    """One-time (init-time) packing of every parameter into a single VMEM slab."""
    # block-diagonal weight: each sub-result lands at its final output lane
    w = jnp.zeros((LHS_W, OUT_W), jnp.float32)
    w = w.at[0:NUM_F, 0:E].set(p["w_num"])                                 # num  -> cols   0:32
    w = w.at[CAT_OFF:CAT_OFF + VOCAB, E + C:2 * E + C].set(p["emb_tab"])   # cat  -> cols  48:80
    w = w.at[E:2 * E, 2 * (E + C):2 * (E + C) + E].set(p["lin_w"])         # time -> cols 96:128

    # constant lanes (biases, column encodings, CLS), pre-broadcast to B rows
    row = jnp.zeros((OUT_W,), jnp.float32)
    row = row.at[0:E].set(p["b_num"][0])
    row = row.at[E:E + C].set(p["col_encoding"][0])
    row = row.at[2 * E + C:2 * (E + C)].set(p["col_encoding"][1])
    row = row.at[2 * (E + C):2 * (E + C) + E].set(p["lin_b"][0])
    row = row.at[3 * E + 2 * C:3 * (E + C)].set(p["col_encoding"][2])
    row = row.at[3 * (E + C):].set(p["cls_embedding"][0, 0])
    const = jnp.broadcast_to(row, (B, OUT_W))

    # Time2Vec / LayerNorm params, pre-broadcast to 8 sublanes
    tp = jnp.zeros((4 * B, OUT_W), jnp.float32)
    tp = tp.at[0:B, 0:E].set(jnp.broadcast_to(p["t2v_w"], (B, E)))
    tp = tp.at[B:2 * B, 0:E].set(jnp.broadcast_to(p["t2v_b"], (B, E)))
    tp = tp.at[2 * B:3 * B, 0:E].set(jnp.broadcast_to(p["ln_g"], (B, E)))
    tp = tp.at[3 * B:4 * B, 0:E].set(jnp.broadcast_to(p["ln_b"], (B, E)))

    return jnp.concatenate([w, const, tp], axis=0)           # (104, 192) ~ 80 KiB


def tabular_input_layer(x_num, cat_idx, x_time, pslab):
    # pack the three activation tensors into one slab -> 2 pallas_call inputs total
    act = jnp.concatenate(
        [x_num, cat_idx.astype(jnp.float32), x_time,
         jnp.zeros((B, ACT_W - NUM_F - 2), jnp.float32)], axis=1)          # (B, 32)

    vmem = pl.BlockSpec(memory_space=pltpu.MemorySpace.VMEM)
    out = pl.pallas_call(
        tabular_kernel,
        out_shape=jax.ShapeDtypeStruct((B, OUT_W), jnp.float32),
        in_specs=[vmem, vmem],
        out_specs=vmem,
        cost_estimate=pl.CostEstimate(
            flops=2 * B * LHS_W * OUT_W + 30 * B * E,
            transcendentals=B * E,
            bytes_accessed=(B * ACT_W + PSLAB_ROWS * OUT_W + B * OUT_W) * 4),
    )(act, pslab)
    # TODO(synk): if the consumer can take the flat (B, 192) slab (or this layer
    # is fused into the consumer kernel), return `out` directly — the reshape
    # below can insert a relayout copy comparable in cost to the kernel itself.
    return out.reshape(B, N_COLS + 1, E + C)


def reference(x_num, cat_idx, x_time, p):
    hi = jax.lax.Precision.HIGHEST
    num = jnp.dot(x_num, p["w_num"], precision=hi) + p["b_num"]
    cat = p["emb_tab"][cat_idx[:, 0]]
    full = x_time * p["t2v_w"] + p["t2v_b"]
    t2v = jnp.concatenate([full[:, :1], jnp.sin(full[:, 1:])], axis=-1)
    mean = t2v.mean(-1, keepdims=True)
    var = ((t2v - mean) ** 2).mean(-1, keepdims=True)
    ln = (t2v - mean) / jnp.sqrt(var + LN_EPS) * p["ln_g"] + p["ln_b"]
    tim = jnp.dot(jnp.maximum(ln, 0.0), p["lin_w"], precision=hi) + p["lin_b"]
    body = jnp.stack([num, cat, tim], axis=1)
    col = jnp.broadcast_to(p["col_encoding"][None], (B, N_COLS, C))
    body = jnp.concatenate([body, col], axis=-1)
    cls = jnp.broadcast_to(p["cls_embedding"], (B, 1, E + C))
    return jnp.concatenate([body, cls], axis=1)


def make_params(key):
    ks = jax.random.split(key, 12)
    n = jax.random.normal
    return {
        "w_num": n(ks[0], (NUM_F, E), jnp.float32) * 0.1,
        "b_num": n(ks[1], (1, E), jnp.float32) * 0.1,
        "emb_tab": n(ks[2], (VOCAB, E), jnp.float32),
        "t2v_w": n(ks[3], (1, E), jnp.float32),       # Time2Vec weight [1, size]
        "t2v_b": n(ks[4], (1, E), jnp.float32),       # Time2Vec bias   [1, size]
        "ln_g": 1.0 + 0.1 * n(ks[5], (1, E), jnp.float32),
        "ln_b": 0.1 * n(ks[6], (1, E), jnp.float32),
        "lin_w": n(ks[7], (E, E), jnp.float32) * 0.1,
        "lin_b": n(ks[8], (1, E), jnp.float32) * 0.1,
        "col_encoding": n(ks[9], (N_COLS, C), jnp.float32),       # N(0, 1)
        "cls_embedding": n(ks[10], (1, 1, E + C), jnp.float32),   # N(0, 1)
    }


if __name__ == "__main__":
    key = jax.random.PRNGKey(0)
    kp, k1, k2, k3 = jax.random.split(key, 4)
    params = make_params(kp)
    pslab = jax.block_until_ready(pack_params(params))       # init-time, off the hot path

    x_num = jax.random.normal(k1, (B, NUM_F), jnp.float32)
    cat_idx = jax.random.randint(k2, (B, 1), 0, VOCAB, dtype=jnp.int32)
    x_time = jax.random.uniform(k3, (B, 1), jnp.float32)

    fwd = jax.jit(tabular_input_layer)
    out = jax.block_until_ready(fwd(x_num, cat_idx, x_time, pslab))

    ref = reference(x_num, cat_idx, x_time, params)
    assert out.shape == (B, N_COLS + 1, E + C), out.shape
    np.testing.assert_allclose(np.asarray(out), np.asarray(ref),
                               rtol=1e-3, atol=1e-3)
    print("KERNEL_OK")
</pallas_src>

<mosaic_0001>
module attributes {stable_mosaic.version = 11 : i64} {
  func.func @tabular_kernel(%arg0: memref<8x32xf32, #tpu.memory_space<vmem>>, %arg1: memref<104x192xf32, #tpu.memory_space<vmem>>, %arg2: memref<8x192xf32, #tpu.memory_space<vmem>>) attributes {dimension_semantics = [], scalar_prefetch = 0 : i64, scratch_operands = 0 : i64, tpu.core_type = #tpu.core_type<tc>} {
    %c0 = arith.constant 0 : index
    %c0_0 = arith.constant 0 : index
    %0 = vector.load %arg0[%c0, %c0_0] : memref<8x32xf32, #tpu.memory_space<vmem>>, vector<8x32xf32>
    %1 = tpu.iota {dimensions = array<i32: 1>} : vector<8x32xi32>
    %2 = vector.extract_strided_slice %0 {offsets = [0, 9], sizes = [8, 1], strides = [1, 1]} : vector<8x32xf32> to vector<8x1xf32>
    %c72 = arith.constant 72 : index
    %c0_1 = arith.constant 0 : index
    %3 = vector.load %arg1[%c72, %c0_1] : memref<104x192xf32, #tpu.memory_space<vmem>>, vector<8x32xf32>
    %c80 = arith.constant 80 : index
    %c0_2 = arith.constant 0 : index
    %4 = vector.load %arg1[%c80, %c0_2] : memref<104x192xf32, #tpu.memory_space<vmem>>, vector<8x32xf32>
    %c88 = arith.constant 88 : index
    %c0_3 = arith.constant 0 : index
    %5 = vector.load %arg1[%c88, %c0_3] : memref<104x192xf32, #tpu.memory_space<vmem>>, vector<8x32xf32>
    %c96 = arith.constant 96 : index
    %c0_4 = arith.constant 0 : index
    %6 = vector.load %arg1[%c96, %c0_4] : memref<104x192xf32, #tpu.memory_space<vmem>>, vector<8x32xf32>
    %7 = vector.broadcast %2 : vector<8x1xf32> to vector<8x32xf32>
    %8 = arith.mulf %7, %3 : vector<8x32xf32>
    %9 = arith.addf %8, %4 : vector<8x32xf32>
    %c0_i32 = arith.constant 0 : i32
    %10 = vector.broadcast %c0_i32 : i32 to vector<8x32xi32>
    %11 = arith.cmpi eq, %1, %10 : vector<8x32xi32>
    %12 = math.sin %9 : vector<8x32xf32>
    %13 = arith.select %11, %9, %12 : vector<8x32xi1>, vector<8x32xf32>
    %cst = arith.constant dense<0.000000e+00> : vector<8xf32>
    %14 = vector.multi_reduction <add>, %13, %cst [1] : vector<8x32xf32> to vector<8xf32>
    %15 = vector.shape_cast %14 : vector<8xf32> to vector<8x1xf32>
    %cst_5 = arith.constant 3.200000e+01 : f32
    %16 = vector.broadcast %cst_5 : f32 to vector<8x1xf32>
    %17 = arith.divf %15, %16 : vector<8x1xf32>
    %18 = vector.broadcast %17 : vector<8x1xf32> to vector<8x32xf32>
    %19 = arith.subf %13, %18 : vector<8x32xf32>
    %20 = arith.mulf %19, %19 : vector<8x32xf32>
    %cst_6 = arith.constant dense<0.000000e+00> : vector<8xf32>
    %21 = vector.multi_reduction <add>, %20, %cst_6 [1] : vector<8x32xf32> to vector<8xf32>
    %22 = vector.shape_cast %21 : vector<8xf32> to vector<8x1xf32>
    %cst_7 = arith.constant 3.200000e+01 : f32
    %23 = vector.broadcast %cst_7 : f32 to vector<8x1xf32>
    %24 = arith.divf %22, %23 : vector<8x1xf32>
    %25 = vector.broadcast %17 : vector<8x1xf32> to vector<8x32xf32>
    %26 = arith.subf %13, %25 : vector<8x32xf32>
    %cst_8 = arith.constant 9.99999974E-6 : f32
    %27 = vector.broadcast %cst_8 : f32 to vector<8x1xf32>
    %28 = arith.addf %24, %27 : vector<8x1xf32>
    %29 = math.rsqrt %28 : vector<8x1xf32>
    %30 = vector.broadcast %29 : vector<8x1xf32> to vector<8x32xf32>
    %31 = arith.mulf %26, %30 : vector<8x32xf32>
    %32 = arith.mulf %31, %5 : vector<8x32xf32>
    %33 = arith.addf %32, %6 : vector<8x32xf32>
    %cst_9 = arith.constant 0.000000e+00 : f32
    %34 = vector.broadcast %cst_9 : f32 to vector<8x32xf32>
    %35 = arith.maximumf %33, %34 : vector<8x32xf32>
    %36 = vector.extract_strided_slice %0 {offsets = [0, 8], sizes = [8, 1], strides = [1, 1]} : vector<8x32xf32> to vector<8x1xf32>
    %37 = arith.fptosi %36 : vector<8x1xf32> to vector<8x1xi32>
    %c8_i32 = arith.constant 8 : i32
    %38 = vector.broadcast %c8_i32 : i32 to vector<8x32xi32>
    %39 = arith.cmpi slt, %1, %38 : vector<8x32xi32>
    %cst_10 = arith.constant 0.000000e+00 : f32
    %40 = vector.broadcast %cst_10 : f32 to vector<8x32xf32>
    %41 = arith.select %39, %0, %40 : vector<8x32xi1>, vector<8x32xf32>
    %c16_i32 = arith.constant 16 : i32
    %42 = vector.broadcast %c16_i32 : i32 to vector<8x1xi32>
    %43 = arith.addi %37, %42 : vector<8x1xi32>
    %44 = vector.broadcast %43 : vector<8x1xi32> to vector<8x32xi32>
    %45 = arith.cmpi eq, %1, %44 : vector<8x32xi32>
    %cst_11 = arith.constant 1.000000e+00 : f32
    %cst_12 = arith.constant 0.000000e+00 : f32
    %46 = vector.broadcast %cst_11 : f32 to vector<8x32xf32>
    %47 = vector.broadcast %cst_12 : f32 to vector<8x32xf32>
    %48 = arith.select %45, %46, %47 : vector<8x32xi1>, vector<8x32xf32>
    %49 = arith.addf %41, %48 : vector<8x32xf32>
    %50 = tpu.concatenate %49, %35 in 1 : vector<8x32xf32>, vector<8x32xf32> -> vector<8x64xf32>
    %c0_13 = arith.constant 0 : index
    %c0_14 = arith.constant 0 : index
    %51 = vector.load %arg1[%c0_13, %c0_14] : memref<104x192xf32, #tpu.memory_space<vmem>>, vector<64x192xf32>
    %c64 = arith.constant 64 : index
    %c0_15 = arith.constant 0 : index
    %52 = vector.load %arg1[%c64, %c0_15] : memref<104x192xf32, #tpu.memory_space<vmem>>, vector<8x192xf32>
    %cst_16 = arith.constant dense<0.000000e+00> : vector<8x192xf32>
    %53 = tpu.matmul %50, %51, %cst_16 {dimension_numbers = #tpu.dot_dimension_numbers<[1], [0], [0], [1], [0, 0, 1, 1], [], []>} : vector<8x64xf32>, vector<64x192xf32>, vector<8x192xf32> -> vector<8x192xf32>
    %54 = arith.addf %53, %52 : vector<8x192xf32>
    %c0_17 = arith.constant 0 : index
    %c0_18 = arith.constant 0 : index
    %55 = vector.load %arg2[%c0_17, %c0_18] : memref<8x192xf32, #tpu.memory_space<vmem>>, vector<8x192xf32>
    tpu.vector_store %arg2[%c0_17, %c0_18], %54 {strides = array<i32>} : memref<8x192xf32, #tpu.memory_space<vmem>>, vector<8x192xf32>,
    return
  }
}

</mosaic_0001>

<llo_original>
// kernel: tabular_input_layer.1
$region0: #{tabular_input_layer.1}
  #allocation0 [shape = 'u32[]', space=smem, size = 0x4, offset = 0x4, fixed_abs, tag = 'smem constant byte address 0x4 - core index']
  #allocation1 [shape = 'u32[144,128]{1,0:T(1,128)}', space=vmem, size = 0x12000, scoped, tag = 'internal scratch']
  %s0 = inlined_call_operand.vmem [shape: f32[8,32], index: 0, kind: input, shape index: {}]
  %s1 = inlined_call_operand.vmem [shape: f32[104,192], index: 1, kind: input, shape index: {}]
  %s2 = inlined_call_operand.vmem [shape: f32[8,192], index: 2, kind: output, shape index: {}]
  %s3 = sld [smem:[#allocation0]]
  $region18: #{tabular_input_layer.1} parent=0
    _
  %s5 = ssub.s32 1, %s3
  %s6 = scalar_select 0, %s5, %s3
  // Predicated region
  $region2: #{tabular_input_layer.1} parent=0 // pred_check
    _
  $region3: #{tabular_input_layer.1} parent=0 // pred_check_branch
    %8 = sbr.rel (0) target = $region5
  $region4: #{tabular_input_layer.1} parent=0 // pred_region
    _
  $region5: #{tabular_input_layer.1} parent=0 // pred_fallthru
    _
  // Predicated region
  $region6: #{tabular_input_layer.1} parent=0 // pred_check
    _
  $region7: #{tabular_input_layer.1} parent=0 // pred_check_branch
    %10 = sbr.rel (0) target = $region9
  $region8: #{tabular_input_layer.1} parent=0 // pred_region
    _
  $region9: #{tabular_input_layer.1} parent=0 // pred_fallthru
    _
  %v11 = vld [vmem:[%s0] sm:$0xff]
  %v12 = vlaneseq
  %v13 = vand.u32 %v12, 127
  %v14 = vld [vmem:[%s1 + $0x90] sm:$0xff]
  %v15 = vld [vmem:[%s1 + $0xa0] sm:$0xff]
  %v16 = vld [vmem:[%s1 + $0xb0] sm:$0xff]
  %v17 = vld [vmem:[%s1 + $0xc0] sm:$0xff]
  %19 = vset.pattern.permute.xlu0 9
  %20 = vperm.xlu0 %19, %v11
  %v21 = vpop.permute.xlu0 %20
  %v23 = vmul.f32 %v21, %v14
  %v24 = vadd.f32 %v23, %v15
  %vm25 = vcmp.eq.s32.totalorder %v13, 0
  %v26 = vand.u32 2147483647, %v24
  %vm27 = vcmp.le.f32.partialorder %v26, 0.7853982
  %vm28 = vcmp.lt.s32.totalorder %v24, 0
  %v29 = vand.u32 %v24, 2139095040
  %v30 = vshrl.u32 %v29, 23
  %v31 = vsub.s32 %v30, 127
  %v32 = vand.u32 2147483647, %v24
  %v33 = vand.u32 %v32, 8388607
  %v34 = vor.u32 %v33, 8388608
  %v35 = vsub.s32 0, %v34
  %v36 = vadd.s32 %v31, 1
  %vm37 = vcmp.gt.s32.totalorder %v36, 0
  %v38 = vsel %vm37, %v36, 0
  %v39 = vshrl.u32 %v38, 5
  %v40 = vand.u32 %v38, 31
  %v41 = vsub.s32 32, %v40
  %v42 = vshrl.u32 683565275, %v41
  %v43 = vshll.u32 683565275, %v40
  %v44 = vshrl.u32 2475754826, %v41
  %v45 = vor.u32 %v43, %v44
  %v46 = vshll.u32 2475754826, %v40
  %v47 = vshrl.u32 2131351028, %v41
  %v48 = vor.u32 %v46, %v47
  %v49 = vshll.u32 2131351028, %v40
  %v50 = vshrl.u32 2102212464, %v41
  %v51 = vor.u32 %v49, %v50
  %v52 = vshll.u32 2102212464, %v40
  %v53 = vshrl.u32 920167782, %v41
  %v54 = vor.u32 %v52, %v53
  %v55 = vshll.u32 920167782, %v40
  %v56 = vshrl.u32 1326507024, %v41
  %v57 = vor.u32 %v55, %v56
  %vm58 = vcmp.lt.s32.totalorder %v39, 1
  %vm59 = vcmp.lt.s32.totalorder %v39, 2
  %vm60 = vcmp.lt.s32.totalorder %v39, 3
  %vm61 = vcmp.lt.s32.totalorder %v39, 4
  %v62 = vsel %vm58, %v42, %v45
  %v63 = vsel %vm61, %v51, 2102212464
  %v64 = vsel %vm60, %v48, %v63
  %v65 = vsel %vm59, %v62, %v64
  %v66 = vsel %vm58, %v45, %v48
  %v67 = vsel %vm61, %v54, 920167782
  %v68 = vsel %vm60, %v51, %v67
  %v69 = vsel %vm59, %v66, %v68
  %v70 = vsel %vm58, %v48, %v51
  %v71 = vsel %vm61, %v57, 1326507024
  %v72 = vsel %vm60, %v54, %v71
  %v73 = vsel %vm59, %v70, %v72
  %v74 = vshll.u32 %v34, 8
  %v75 = vmul.u32.u64.compose %v74, %v73
  %v76 = vextract.low.u32 %v75
  %v77 = vextract.high.u32 %v75
  %v78 = vmul.u32.u64.compose %v74, %v69
  %v79 = vextract.low.u32 %v78
  %v80 = vextract.high.u32 %v78
  %v81 = vmul.u32 %v74, %v65
  %v82 = vadd.s32 %v77, %v79
  %vm83 = vc.u32 %v77, %v79
  %v84 = vadd.s32 %v80, 1
  %v85 = vsel %vm83, %v84, %v80
  %v86 = vadd.s32 %v81, %v85
  %v87 = vadd.s32 %v86, 536870912
  %v88 = vshrl.u32 %v87, 30
  %v89 = vshll.u32 %v88, 30
  %v90 = vsub.s32 %v86, %v89
  %vm91 = vcmp.lt.s32.totalorder %v90, 0
  %v92 = vsub.s32 0, %v90
  %v93 = vsel %vm91, %v92, %v90
  %v94 = vclz %v93
  %v95 = vsub.s32 %v94, 2
  %vm96 = vcmp.gt.s32.totalorder 0, %v95
  %v97 = vsel %vm96, 0, %v95
  %v98 = vsub.s32 32, %v97
  %v99 = vshll.u32 %v90, %v97
  %v100 = vshrl.u32 %v82, %v98
  %v101 = vor.u32 %v99, %v100
  %v102 = vsub.s32 4294967266, %v97
  %v103 = vadd.s32 %v102, 127
  %v104 = vshll.u32 %v103, 23
  %v105 = vor.u32 4788187, %v104
  %v106 = vand.u32 2147483647, %v105
  %v108 = vcvt.s32.f32 %v101
  %v109 = vmul.f32 %v108, %v106
  %v110 = vxor.u32 %v109, 2147483648
  %v111 = vsel %vm28, %v110, %v109
  %v112 = vsub.s32 4, %v88
  %v113 = vsel %vm28, %v112, %v88
  %v114 = vsel %vm27, %v24, %v111
  %v115 = vsel %vm27, 0, %v113
  %v116 = vcosq.f32.pop %v114
  %v117 = vsinq.f32.pop %v114
  %vm118 = vweird.f32 %v24
  %v119 = vadd.s32 %v115, 3
  %v120 = vand.u32 %v119, 3
  %vm121 = vcmp.lt.s32.totalorder %v120, 2
  %vm122 = vcmp.eq.s32.totalorder %v120, 0
  %v123 = vxor.u32 %v117, 2147483648
  %v124 = vsel %vm122, %v116, %v123
  %vm125 = vcmp.eq.s32.totalorder %v120, 2
  %v126 = vxor.u32 %v116, 2147483648
  %v127 = vsel %vm125, %v126, %v117
  %v128 = vsel %vm121, %v124, %v127
  %v129 = vsel %vm118, nan, %v128
  %v130 = vsel %vm25, %v24, %v129
  %vm131 = vcmask 261120
  %v132 = vsel %vm131, %v130, 0.0
  %133 = vadd.xlane.f32.xlu0 %v132
  %v134 = vpop.xlane.xlu0 %133
  %v135 = vrcp.pop 32.0
  %v136 = vmul.f32 %v134, %v135
  %v137 = vsub.f32 %v130, %v136
  %v138 = vmul.f32 %v137, %v137
  %v139 = vsel %vm131, %v138, 0.0
  %140 = vadd.xlane.f32.xlu0 %v139
  %v141 = vpop.xlane.xlu0 %140
  %v142 = vmul.f32 %v141, %v135
  %v143 = vadd.f32 %v142, 1e-05
  %v144 = vrsqrt.pop %v143
  %v145 = vmul.f32 %v137, %v144
  %v146 = vmul.f32 %v145, %v16
  %v147 = vadd.f32 %v146, %v17
  %v148 = vmax.f32 %v147, 0.0
  %v149 = vcvt.f32.s32.to.zero.pseudo %v11
  %vm150 = vcmp.lt.s32.totalorder %v13, 8
  %v151 = vsel %vm150, %v11, 0.0
  %v152 = vadd.s32 %v149, 16
  %153 = vset.pattern.permute.xlu0 8
  %154 = vperm.xlu0 %153, %v152
  %v155 = vpop.permute.xlu0 %154
  %vm156 = vcmp.eq.s32.totalorder %v13, %v155
  %v157 = vsel %vm156, 1.0, 0.0
  %v158 = vadd.f32 %v151, %v157
  %160 = vrot.lane.b32.xlu0 %v148, 32
  %v161 = vpop.permute.xlu0 %160
  %v163 = vsel %vm131, %v158, %v161
  %v164 = vld [vmem:[%s1] sm:$0xff]
  %v165 = vld [vmem:[%s1 + $0x8] sm:$0xff]
  %v166 = vld [vmem:[%s1 + $0x10] sm:$0xff]
  %v167 = vld [vmem:[%s1 + $0x18] sm:$0xff]
  %v168 = vld [vmem:[%s1 + $0x20] sm:$0xff]
  %v169 = vld [vmem:[%s1 + $0x28] sm:$0xff]
  %v170 = vld [vmem:[%s1 + $0x30] sm:$0xff]
  %v171 = vld [vmem:[%s1 + $0x38] sm:$0xff]
  %v172 = vld [vmem:[%s1 + $0x40] sm:$0xff]
  %v173 = vld [vmem:[%s1 + $0x48] sm:$0xff]
  %v174 = vld [vmem:[%s1 + $0x50] sm:$0xff]
  %v175 = vld [vmem:[%s1 + $0x58] sm:$0xff]
  %v176 = vld [vmem:[%s1 + $0x60] sm:$0xff]
  %v177 = vld [vmem:[%s1 + $0x68] sm:$0xff]
  %v178 = vld [vmem:[%s1 + $0x70] sm:$0xff]
  %v179 = vld [vmem:[%s1 + $0x78] sm:$0xff]
  %v180 = vld [vmem:[%s1 + $0x80] sm:$0xff]
  %v181 = vld [vmem:[%s1 + $0x88] sm:$0xff]
  %vm182 = vcmask 523264
  %v184 = vsel %vm182, %v163, 0
  %186 = vmatprep.subr.mxu0 %v165
  %187 = vmatpush1.msra.mxu0 %v164
  %188 = vmatprep.subr.mxu0 %v167
  %189 = vmatpush1.msra.mxu0 %v166
  %190 = vmatprep.subr.mxu0 %v169
  %191 = vmatpush1.msra.mxu0 %v168
  %192 = vmatprep.subr.mxu0 %v171
  %193 = vmatpush1.msra.mxu0 %v170
  %194 = vmatprep.subr.mxu0 %v173
  %195 = vmatpush1.msra.mxu0 %v172
  %196 = vmatprep.subr.mxu0 %v175
  %197 = vmatpush1.msra.mxu0 %v174
  %198 = vmatprep.subr.mxu0 %v177
  %199 = vmatpush1.msra.mxu0 %v176
  %200 = vmatprep.subr.mxu0 %v179
  %201 = vmatpush1.msra.mxu0 %v178
  %202 = vmatprep.subr.mxu0 0.0
  %203 = vmatpush1.msra.mxu0 0.0
  %204 = vmatprep.subr.mxu0 0.0
  %205 = vmatpush1.msra.mxu0 0.0
  %206 = vmatprep.subr.mxu0 0.0
  %207 = vmatpush1.msra.mxu0 0.0
  %208 = vmatprep.subr.mxu0 0.0
  %209 = vmatpush1.msra.mxu0 0.0
  %210 = vmatprep.subr.mxu0 0.0
  %211 = vmatpush1.msra.mxu0 0.0
  %212 = vmatprep.subr.mxu0 0.0
  %213 = vmatpush1.msra.mxu0 0.0
  %214 = vmatprep.subr.mxu0 0.0
  %215 = vmatpush1.msra.mxu0 0.0
  %216 = vmatprep.subr.mxu0 0.0
  %217 = vmatpush1.msra.mxu0 0.0
  %218 = vmatprep.subr.mxu0 0.0
  %219 = vmatpush1.msra.mxu0 0.0
  %220 = vmatprep.subr.mxu0 0.0
  %221 = vmatpush1.msra.mxu0 0.0
  %222 = vmatprep.subr.mxu0 0.0
  %223 = vmatpush1.msra.mxu0 0.0
  %224 = vmatprep.subr.mxu0 0.0
  %225 = vmatpush1.msra.mxu0 0.0
  %226 = vmatprep.subr.mxu0 0.0
  %227 = vmatpush1.msra.mxu0 0.0
  %228 = vmatprep.subr.mxu0 0.0
  %229 = vmatpush1.msra.mxu0 0.0
  %230 = vmatprep.subr.mxu0 0.0
  %231 = vmatpush1.msra.mxu0 0.0
  %232 = vmatprep.subr.mxu0 0.0
  %233 = vmatpush1.msra.mxu0 0.0
  %234 = vmatprep.subr.mxu0 0.0
  %235 = vmatpush1.msra.mxu0 0.0
  %236 = vmatprep.subr.mxu0 0.0
  %237 = vmatpush1.msra.mxu0 0.0
  %238 = vmatprep.subr.mxu0 0.0
  %239 = vmatpush1.msra.mxu0 0.0
  %240 = vmatprep.subr.mxu0 0.0
  %241 = vmatpush1.msra.mxu0 0.0
  %242 = vmatprep.subr.mxu0 0.0
  %243 = vmatpush1.msra.mxu0 0.0
  %244 = vmatprep.subr.mxu0 0.0
  %245 = vmatpush1.msra.mxu0 0.0
  %246 = vmatprep.subr.mxu0 0.0
  %247 = vmatpush1.msra.mxu0 0.0
  %248 = vmatprep.subr.mxu0 0.0
  %249 = vmatpush1.msra.mxu0 0.0
  %250 = vmatprep.mubr.f32.mxu0 0.0
  %251 = vmatmul.mubr.f32.gmra.mrb[0].mxu0 %v184
  %v252 = vpop.f32.mrb[0].mxu0
  %v253 = vadd.f32 %v180, %v252
  %v254 = vpop.f32.mrb[0].mxu0
  %v255 = vadd.f32 %v181, %v254
  %256 = vdwg.mxu0
  %257 = vst [vmem:[%s2] sm:$0xff] %v253
  %258 = vst.msk [vmem:[%s2 + $0x8] sm:$0xff] %vm182, %v255
  // Predicated region
  $region10: #{tabular_input_layer.1} parent=0 // pred_check
    _
  $region11: #{tabular_input_layer.1} parent=0 // pred_check_branch
    %260 = sbr.rel (0) target = $region13
  $region12: #{tabular_input_layer.1} parent=0 // pred_region
    _
  $region13: #{tabular_input_layer.1} parent=0 // pred_fallthru
    _
  // Predicated region
  $region14: #{tabular_input_layer.1} parent=0 // pred_check
    _
  $region15: #{tabular_input_layer.1} parent=0 // pred_check_branch
    %262 = sbr.rel (0) target = $region17
  $region16: #{tabular_input_layer.1} parent=0 // pred_region
    _
  $region17: #{tabular_input_layer.1} parent=0 // pred_fallthru
    _

</llo_original>
